<compile_context>
chip_gen: v5e
topology: v5e:2x2
jax: 0.10.0
libtpu: 0.0.40
codegen_flags: <defaults>
</compile_context>

<pallas_src>
import functools

import jax
import jax.numpy as jnp
from jax.experimental import pallas as pl
from jax.experimental.pallas import tpu as pltpu


NUM_LAYERS = 5
NUM_UNITS = 200
H_PAD = 256      # hidden width padded to a full 256-lane MXU tile
LAST_PAD = 8     # final-layer weight padded to 8 sublanes (rows 1..7 zero)


def _round_up(x, m):
    return ((x + m - 1) // m) * m


def _disc_mlp_kernel(x_ref, w0_ref, wh_ref, b_ref, wl_ref, bl_ref, out_ref, *,
                     n_hidden):
    """One batch tile of the full MLP; logits land lane-dense in (1, block_b)."""
    x = x_ref[...]                          # (block_b, IN_PAD) bf16, pre-cast
    biases = b_ref[...]                     # (n_hidden + 1, H_PAD) f32

    # Layer 0: fused (feature ++ attribute) input, single K=IN_PAD MXU dot.
    acc = jnp.dot(x, w0_ref[...], preferred_element_type=jnp.float32)
    h = jnp.maximum(acc + biases[0:1, :], 0.0).astype(jnp.bfloat16)

    # Hidden layers (static unroll): bf16 MXU dots, f32 bias + ReLU, bf16 carry.
    for j in range(n_hidden):
        acc = jnp.dot(h, wh_ref[j], preferred_element_type=jnp.float32)
        h = jnp.maximum(acc + biases[j + 1:j + 2, :], 0.0).astype(jnp.bfloat16)

    # Final Linear(H -> 1) as an NT dot (w_row @ h^T): result (8, block_b) f32
    # with only row 0 real -> the per-row logit is already lane-dense, so the
    # output write is 4 useful bytes/row instead of a 512 B padded slab.
    logit8 = jax.lax.dot_general(
        wl_ref[...], h, dimension_numbers=(((1,), (1,)), ((), ())),
        preferred_element_type=jnp.float32)
    out_ref[...] = logit8[0:1, :] + bl_ref[...]


def prepare_discriminator_params(params):
    """Pack/pad the per-layer (W, b) params once, outside the forward pass.

    Returns a dict of kernel-ready arrays:
      w0 : (IN_PAD, H_PAD)            bf16   merged first-layer weight
      wh : (n_hidden, H_PAD, H_PAD)   bf16   stacked hidden weights
      b  : (n_hidden + 1, H_PAD)      f32    stacked biases (layers 0..n-2)
      wl : (LAST_PAD, H_PAD)          bf16   last-layer weight as a padded row
      bl : (1, 1)                     f32    last-layer bias
    Zero padding is exact: padded lanes/rows stay zero through bias + ReLU.
    """
    n = len(params)
    assert n >= 3, "kernel packing assumes num_layers >= 3"
    w0, b0 = params[0]
    in_dim, h0 = w0.shape
    assert h0 <= H_PAD, f"num_units {h0} exceeds H_PAD={H_PAD}"
    for w, _ in params[1:-1]:
        assert w.shape[0] <= H_PAD and w.shape[1] <= H_PAD
    wl, bl = params[-1]
    assert wl.shape[1] == 1, "lane-packed output assumes a single logit"
    assert wl.shape[0] <= H_PAD

    in_pad = _round_up(in_dim, 128)
    w0p = (jnp.zeros((in_pad, H_PAD), jnp.float32)
           .at[:in_dim, :h0].set(w0.astype(jnp.float32))
           .astype(jnp.bfloat16))

    n_hidden = n - 2
    wh = jnp.zeros((n_hidden, H_PAD, H_PAD), jnp.float32)
    biases = jnp.zeros((n - 1, H_PAD), jnp.float32)
    biases = biases.at[0, :h0].set(b0.reshape(-1).astype(jnp.float32))
    for j, (w, b) in enumerate(params[1:-1]):
        wi, wo = w.shape
        wh = wh.at[j, :wi, :wo].set(w.astype(jnp.float32))
        biases = biases.at[j + 1, :wo].set(b.reshape(-1).astype(jnp.float32))
    wh = wh.astype(jnp.bfloat16)

    wlp = (jnp.zeros((LAST_PAD, H_PAD), jnp.float32)
           .at[0, :wl.shape[0]].set(wl[:, 0].astype(jnp.float32))
           .astype(jnp.bfloat16))
    blp = jnp.asarray(bl, jnp.float32).reshape(1, 1)

    return {"w0": w0p, "wh": wh, "b": biases, "wl": wlp, "bl": blp}


def _choose_block_b(batch):
    if batch <= 256:
        # Single block; multiple of 16 so bf16 sublane packing is full.
        return _round_up(batch, 16)
    # >= 2 blocks (keeps both v7x TensorCores busy on the "parallel" axis),
    # rows a multiple of 128 (lane-dense output blocks), capped at 1024.
    return min(1024, _round_up((batch + 1) // 2, 128))


def discriminator_forward(input_feature, input_attribute, kparams):
    """Forward pass. kparams must come from prepare_discriminator_params."""
    batch = input_feature.shape[0]
    feat = input_feature.reshape(batch, -1)
    x = jnp.concatenate([feat, input_attribute], axis=1).astype(jnp.bfloat16)
    in_dim = x.shape[1]
    in_pad = kparams["w0"].shape[0]
    n_hidden = kparams["wh"].shape[0]

    block_b = _choose_block_b(batch)
    b_pad = _round_up(batch, block_b)
    x = jnp.pad(x, ((0, b_pad - batch), (0, in_pad - in_dim)))

    grid = (b_pad // block_b,)

    in_specs = [
        pl.BlockSpec((block_b, in_pad), lambda i: (i, 0)),
        # Grid-invariant packed parameters: constant index_maps, fetched once.
        pl.BlockSpec(kparams["w0"].shape, lambda i: (0, 0)),
        pl.BlockSpec(kparams["wh"].shape, lambda i: (0, 0, 0)),
        pl.BlockSpec(kparams["b"].shape, lambda i: (0, 0)),
        pl.BlockSpec(kparams["wl"].shape, lambda i: (0, 0)),
        pl.BlockSpec(kparams["bl"].shape, lambda i: (0, 0)),
    ]
    out_spec = pl.BlockSpec((1, block_b), lambda i: (0, i))
    out_shape = jax.ShapeDtypeStruct((1, b_pad), jnp.float32)

    fn = pl.pallas_call(
        functools.partial(_disc_mlp_kernel, n_hidden=n_hidden),
        out_shape=out_shape,
        grid=grid,
        in_specs=in_specs,
        out_specs=out_spec,
        compiler_params=pltpu.CompilerParams(
            dimension_semantics=("parallel",)),
    )
    out_row = fn(x, kparams["w0"], kparams["wh"], kparams["b"],
                 kparams["wl"], kparams["bl"])
    return out_row[0, :batch].reshape(batch, 1)


discriminator_forward_jit = jax.jit(discriminator_forward)


def init_discriminator_params(key, input_size, num_layers=NUM_LAYERS,
                              num_units=NUM_UNITS):
    """Deterministic synthetic init (Xavier-ish normal), shapes match nn.Linear."""
    dims = [input_size] + [num_units] * (num_layers - 1) + [1]
    params = []
    for i in range(num_layers):
        key, wk = jax.random.split(key)
        fan_in, fan_out = dims[i], dims[i + 1]
        scale = jnp.sqrt(2.0 / (fan_in + fan_out))
        w = scale * jax.random.normal(wk, (fan_in, fan_out), dtype=jnp.float32)
        b = jnp.zeros((1, fan_out), dtype=jnp.float32)
        params.append((w, b))
    return params


def reference_forward(input_feature, input_attribute, params):
    """Pure-JAX f32 reference mirroring the PyTorch forward."""
    batch = input_feature.shape[0]
    x = jnp.concatenate(
        [input_feature.reshape(batch, -1), input_attribute], axis=1
    ).astype(jnp.float32)
    n = len(params)
    for i, (w, b) in enumerate(params):
        x = x @ w + b
        if i != n - 1:
            x = jnp.maximum(x, 0.0)
    return x


if __name__ == "__main__":
    key = jax.random.PRNGKey(0)

    # Small shapes consistent with the module:
    #   input_feature_shape   = (B, T, F) = (2, 8, 4)
    #   input_attribute_shape = (B, A)    = (2, 4)
    #   input_size = T*F + A = 36
    B, T, F_DIM, A = 2, 8, 4, 4
    k_feat, k_attr, k_params, k2 = jax.random.split(key, 4)
    input_feature = jax.random.normal(k_feat, (B, T, F_DIM), dtype=jnp.float32)
    input_attribute = jax.random.normal(k_attr, (B, A), dtype=jnp.float32)

    input_size = T * F_DIM + A
    params = init_discriminator_params(k_params, input_size)

    # Hoisted: pack/pad the weights once, not per forward call.
    kparams = prepare_discriminator_params(params)

    out = discriminator_forward_jit(input_feature, input_attribute, kparams)
    out = jax.block_until_ready(out)
    ref = reference_forward(input_feature, input_attribute, params)
    assert out.shape == (B, 1), out.shape
    # bf16 MXU inputs with f32 accumulation: compare against the f32 reference
    # at GAN-discriminator tolerance.
    assert jnp.allclose(out, ref, atol=1e-2, rtol=1e-2), (out, ref)

    # Larger batch exercises the multi-block batch grid (padding + 2 blocks).
    B2 = 300
    kf2, ka2 = jax.random.split(k2)
    feat2 = jax.random.normal(kf2, (B2, T, F_DIM), dtype=jnp.float32)
    attr2 = jax.random.normal(ka2, (B2, A), dtype=jnp.float32)
    out2 = jax.block_until_ready(
        discriminator_forward_jit(feat2, attr2, kparams))
    ref2 = reference_forward(feat2, attr2, params)
    assert out2.shape == (B2, 1), out2.shape
    assert jnp.allclose(out2, ref2, atol=1e-2, rtol=1e-2)

    print("KERNEL_OK")
</pallas_src>

<mosaic_0001>
module attributes {stable_mosaic.version = 11 : i64} {
  func.func @_disc_mlp_kernel(%arg0: i32, %arg1: memref<16x128xbf16, #tpu.memory_space<vmem>>, %arg2: memref<128x256xbf16, #tpu.memory_space<vmem>>, %arg3: memref<3x256x256xbf16, #tpu.memory_space<vmem>>, %arg4: memref<4x256xf32, #tpu.memory_space<vmem>>, %arg5: memref<8x256xbf16, #tpu.memory_space<vmem>>, %arg6: memref<1x1xf32, #tpu.memory_space<vmem>>, %arg7: memref<1x16xf32, #tpu.memory_space<vmem>>) attributes {dimension_semantics = [#tpu.dimension_semantics<parallel>], iteration_bounds = array<i64: 1>, scalar_prefetch = 0 : i64, scratch_operands = 0 : i64, tpu.core_type = #tpu.core_type<tc>, window_params = [{transform_indices = @transform_0, window_bounds = array<i64: 16, 128>}, {pipeline_mode = #tpu.pipeline_mode<synchronous>, transform_indices = @transform_1, window_bounds = array<i64: 128, 256>}, {pipeline_mode = #tpu.pipeline_mode<synchronous>, transform_indices = @transform_2, window_bounds = array<i64: 3, 256, 256>}, {pipeline_mode = #tpu.pipeline_mode<synchronous>, transform_indices = @transform_3, window_bounds = array<i64: 4, 256>}, {pipeline_mode = #tpu.pipeline_mode<synchronous>, transform_indices = @transform_4, window_bounds = array<i64: 8, 256>}, {pipeline_mode = #tpu.pipeline_mode<synchronous>, transform_indices = @transform_5, window_bounds = array<i64: 1, 1>}, {transform_indices = @transform_6, window_bounds = array<i64: 1, 16>}]} {
    %c0 = arith.constant 0 : index
    %c0_0 = arith.constant 0 : index
    %0 = vector.load %arg1[%c0, %c0_0] : memref<16x128xbf16, #tpu.memory_space<vmem>>, vector<16x128xbf16>
    %c0_1 = arith.constant 0 : index
    %c0_2 = arith.constant 0 : index
    %1 = vector.load %arg4[%c0_1, %c0_2] : memref<4x256xf32, #tpu.memory_space<vmem>>, vector<4x256xf32>
    %c0_3 = arith.constant 0 : index
    %c0_4 = arith.constant 0 : index
    %2 = vector.load %arg2[%c0_3, %c0_4] : memref<128x256xbf16, #tpu.memory_space<vmem>>, vector<128x256xbf16>
    %cst = arith.constant dense<0.000000e+00> : vector<16x256xf32>
    %3 = tpu.matmul %0, %2, %cst {dimension_numbers = #tpu.dot_dimension_numbers<[1], [0], [0], [1], [0, 0, 1, 1], [], []>} : vector<16x128xbf16>, vector<128x256xbf16>, vector<16x256xf32> -> vector<16x256xf32>
    %4 = vector.extract_strided_slice %1 {offsets = [0, 0], sizes = [1, 256], strides = [1, 1]} : vector<4x256xf32> to vector<1x256xf32>
    %5 = vector.broadcast %4 : vector<1x256xf32> to vector<16x256xf32>
    %6 = arith.addf %3, %5 : vector<16x256xf32>
    %cst_5 = arith.constant 0.000000e+00 : f32
    %7 = vector.broadcast %cst_5 : f32 to vector<16x256xf32>
    %8 = arith.maximumf %6, %7 : vector<16x256xf32>
    %9 = arith.truncf %8 : vector<16x256xf32> to vector<16x256xbf16>
    %c0_6 = arith.constant 0 : index
    %c0_7 = arith.constant 0 : index
    %c0_8 = arith.constant 0 : index
    %10 = vector.load %arg3[%c0_6, %c0_7, %c0_8] : memref<3x256x256xbf16, #tpu.memory_space<vmem>>, vector<1x256x256xbf16>
    %11 = vector.shape_cast %10 : vector<1x256x256xbf16> to vector<256x256xbf16>
    %cst_9 = arith.constant dense<0.000000e+00> : vector<16x256xf32>
    %12 = tpu.matmul %9, %11, %cst_9 {dimension_numbers = #tpu.dot_dimension_numbers<[1], [0], [0], [1], [0, 0, 1, 1], [], []>} : vector<16x256xbf16>, vector<256x256xbf16>, vector<16x256xf32> -> vector<16x256xf32>
    %13 = vector.extract_strided_slice %1 {offsets = [1, 0], sizes = [1, 256], strides = [1, 1]} : vector<4x256xf32> to vector<1x256xf32>
    %14 = vector.broadcast %13 : vector<1x256xf32> to vector<16x256xf32>
    %15 = arith.addf %12, %14 : vector<16x256xf32>
    %cst_10 = arith.constant 0.000000e+00 : f32
    %16 = vector.broadcast %cst_10 : f32 to vector<16x256xf32>
    %17 = arith.maximumf %15, %16 : vector<16x256xf32>
    %18 = arith.truncf %17 : vector<16x256xf32> to vector<16x256xbf16>
    %c1 = arith.constant 1 : index
    %c0_11 = arith.constant 0 : index
    %c0_12 = arith.constant 0 : index
    %19 = vector.load %arg3[%c1, %c0_11, %c0_12] : memref<3x256x256xbf16, #tpu.memory_space<vmem>>, vector<1x256x256xbf16>
    %20 = vector.shape_cast %19 : vector<1x256x256xbf16> to vector<256x256xbf16>
    %cst_13 = arith.constant dense<0.000000e+00> : vector<16x256xf32>
    %21 = tpu.matmul %18, %20, %cst_13 {dimension_numbers = #tpu.dot_dimension_numbers<[1], [0], [0], [1], [0, 0, 1, 1], [], []>} : vector<16x256xbf16>, vector<256x256xbf16>, vector<16x256xf32> -> vector<16x256xf32>
    %22 = vector.extract_strided_slice %1 {offsets = [2, 0], sizes = [1, 256], strides = [1, 1]} : vector<4x256xf32> to vector<1x256xf32>
    %23 = vector.broadcast %22 : vector<1x256xf32> to vector<16x256xf32>
    %24 = arith.addf %21, %23 : vector<16x256xf32>
    %cst_14 = arith.constant 0.000000e+00 : f32
    %25 = vector.broadcast %cst_14 : f32 to vector<16x256xf32>
    %26 = arith.maximumf %24, %25 : vector<16x256xf32>
    %27 = arith.truncf %26 : vector<16x256xf32> to vector<16x256xbf16>
    %c2 = arith.constant 2 : index
    %c0_15 = arith.constant 0 : index
    %c0_16 = arith.constant 0 : index
    %28 = vector.load %arg3[%c2, %c0_15, %c0_16] : memref<3x256x256xbf16, #tpu.memory_space<vmem>>, vector<1x256x256xbf16>
    %29 = vector.shape_cast %28 : vector<1x256x256xbf16> to vector<256x256xbf16>
    %cst_17 = arith.constant dense<0.000000e+00> : vector<16x256xf32>
    %30 = tpu.matmul %27, %29, %cst_17 {dimension_numbers = #tpu.dot_dimension_numbers<[1], [0], [0], [1], [0, 0, 1, 1], [], []>} : vector<16x256xbf16>, vector<256x256xbf16>, vector<16x256xf32> -> vector<16x256xf32>
    %31 = vector.extract_strided_slice %1 {offsets = [3, 0], sizes = [1, 256], strides = [1, 1]} : vector<4x256xf32> to vector<1x256xf32>
    %32 = vector.broadcast %31 : vector<1x256xf32> to vector<16x256xf32>
    %33 = arith.addf %30, %32 : vector<16x256xf32>
    %cst_18 = arith.constant 0.000000e+00 : f32
    %34 = vector.broadcast %cst_18 : f32 to vector<16x256xf32>
    %35 = arith.maximumf %33, %34 : vector<16x256xf32>
    %36 = arith.truncf %35 : vector<16x256xf32> to vector<16x256xbf16>
    %c0_19 = arith.constant 0 : index
    %c0_20 = arith.constant 0 : index
    %37 = vector.load %arg5[%c0_19, %c0_20] : memref<8x256xbf16, #tpu.memory_space<vmem>>, vector<8x256xbf16>
    %cst_21 = arith.constant dense<0.000000e+00> : vector<8x16xf32>
    %38 = tpu.matmul %37, %36, %cst_21 {dimension_numbers = #tpu.dot_dimension_numbers<[1], [1], [0], [0], [0, 0, 1, 0], [], []>} : vector<8x256xbf16>, vector<16x256xbf16>, vector<8x16xf32> -> vector<8x16xf32>
    %39 = vector.extract_strided_slice %38 {offsets = [0, 0], sizes = [1, 16], strides = [1, 1]} : vector<8x16xf32> to vector<1x16xf32>
    %c0_22 = arith.constant 0 : index
    %c0_23 = arith.constant 0 : index
    %40 = vector.load %arg6[%c0_22, %c0_23] : memref<1x1xf32, #tpu.memory_space<vmem>>, vector<1x1xf32>
    %41 = vector.broadcast %40 : vector<1x1xf32> to vector<1x16xf32>
    %42 = arith.addf %39, %41 : vector<1x16xf32>
    %c0_24 = arith.constant 0 : index
    %c0_25 = arith.constant 0 : index
    %43 = vector.load %arg7[%c0_24, %c0_25] : memref<1x16xf32, #tpu.memory_space<vmem>>, vector<1x16xf32>
    tpu.vector_store %arg7[%c0_24, %c0_25], %42 {strides = array<i32>} : memref<1x16xf32, #tpu.memory_space<vmem>>, vector<1x16xf32>,
    return
  }
  func.func @transform_0(%arg0: i32) -> (i32, i32) {
    %c0_i32 = arith.constant 0 : i32
    %c0_i32_0 = arith.constant 0 : i32
    return %arg0, %c0_i32 : i32, i32
  }
  func.func @transform_1(%arg0: i32) -> (i32, i32) {
    %c0_i32 = arith.constant 0 : i32
    %c0_i32_0 = arith.constant 0 : i32
    %c0_i32_1 = arith.constant 0 : i32
    return %c0_i32, %c0_i32_0 : i32, i32
  }
  func.func @transform_2(%arg0: i32) -> (i32, i32, i32) {
    %c0_i32 = arith.constant 0 : i32
    %c0_i32_0 = arith.constant 0 : i32
    %c0_i32_1 = arith.constant 0 : i32
    %c0_i32_2 = arith.constant 0 : i32
    return %c0_i32, %c0_i32_0, %c0_i32_1 : i32, i32, i32
  }
  func.func @transform_3(%arg0: i32) -> (i32, i32) {
    %c0_i32 = arith.constant 0 : i32
    %c0_i32_0 = arith.constant 0 : i32
    %c0_i32_1 = arith.constant 0 : i32
    return %c0_i32, %c0_i32_0 : i32, i32
  }
  func.func @transform_4(%arg0: i32) -> (i32, i32) {
    %c0_i32 = arith.constant 0 : i32
    %c0_i32_0 = arith.constant 0 : i32
    %c0_i32_1 = arith.constant 0 : i32
    return %c0_i32, %c0_i32_0 : i32, i32
  }
  func.func @transform_5(%arg0: i32) -> (i32, i32) {
    %c0_i32 = arith.constant 0 : i32
    %c0_i32_0 = arith.constant 0 : i32
    %c0_i32_1 = arith.constant 0 : i32
    return %c0_i32, %c0_i32_0 : i32, i32
  }
  func.func @transform_6(%arg0: i32) -> (i32, i32) {
    %c0_i32 = arith.constant 0 : i32
    %c0_i32_0 = arith.constant 0 : i32
    return %c0_i32, %arg0 : i32, i32
  }
}

</mosaic_0001>

<llo_original>
// kernel: discriminator_forward.1
$region0: #{discriminator_forward.1}
  #allocation0 [shape = 'u32[]', space=smem, size = 0x4, offset = 0x4, fixed_abs, tag = 'smem constant byte address 0x4 - core index']
  #allocation1 [shape = 'u32[72,128]{1,0:T(1,128)}', space=vmem, size = 0x9000, scoped, tag = 'internal scratch']
  #allocation2 [shape = 'f32[1,1]{1,0:T(1,128)S(1)}', space=vmem, size = 0x200, scoped, tag = 'scoped memory for discriminator_forward.1']
  %s0 = inlined_call_operand.vmem [shape: bf16[16,128], index: 0, kind: input, shape index: {}]
  %s1 = inlined_call_operand.hbm [shape: bf16[128,256], index: 1, kind: input, shape index: {}]
  %s2 = inlined_call_operand.hbm [shape: bf16[3,256,256], index: 2, kind: input, shape index: {}]
  %s3 = inlined_call_operand.vmem [shape: f32[4,256], index: 3, kind: input, shape index: {}]
  %s4 = inlined_call_operand.vmem [shape: bf16[8,256], index: 4, kind: input, shape index: {}]
  %s5 = inlined_call_operand.<no memory space> [shape: f32[1,1], index: 5, kind: input, shape index: {}]
  %s6 = inlined_call_operand.vmem [shape: f32[1,16], index: 6, kind: output, shape index: {}]
  %s7 = sld [smem:[#allocation0]]
  $region42: #{discriminator_forward.1} parent=0
    _
  %s9 = ssub.s32 1, %s7
  %s10 = scalar_select 0, %s9, %s7
  %v11 = vstv %s5
  %12 = vst [vmem:[#allocation2] sm:$0x1] %v11
  $region1: #{discriminator_forward.1} parent=0
    #allocation3 [shape = 'u8[65536]{0}', space=vmem, size = 0x10000, scoped, tag = 'input window, operand 1, single buffered']
    #allocation4 [shape = 's32[1]{0}', space=sflag, size = 0x4, scoped, tag = 'scoped memory for discriminator_forward.1']
    #allocation5 [shape = 'u8[393216]{0}', space=vmem, size = 0x60000, scoped, tag = 'input window, operand 2, single buffered']
    #allocation6 [shape = 's32[1]{0}', space=sflag, size = 0x4, scoped, tag = 'scoped memory for discriminator_forward.1']
    %13 = vsyncpa [#allocation4], 0
    %14 = vsyncpa [#allocation6], 0
    // Predicated region
    $region2: #{discriminator_forward.1} parent=1 // pred_check
      _
    $region3: #{discriminator_forward.1} parent=1 // pred_check_branch
      %16 = sbr.rel (0) target = $region5
    $region4: #{discriminator_forward.1} parent=1 // pred_region
      _
    $region5: #{discriminator_forward.1} parent=1 // pred_fallthru
      _
    // Predicated region
    $region6: #{discriminator_forward.1} parent=1 // pred_check
      _
    $region7: #{discriminator_forward.1} parent=1 // pred_check_branch
      %18 = sbr.rel (0) target = $region9
    $region8: #{discriminator_forward.1} parent=1 // pred_region
      %20 = vsyncadd [#allocation4], 0
      %s21 = sshll.u32 %s1, 4
      %s22 = int_to_ptr.hbm [resolvable:$true] %s21
      %s23 = sshll.u32 [#allocation3], 4
      %s24 = int_to_ptr.vmem [resolvable:$true] %s23
      %29 = dma.hbm_to_vmem [thread:$0]  %s22, 2048, %s24, [#allocation4], 128, 128, 8
    $region9: #{discriminator_forward.1} parent=1 // pred_fallthru
      _
    // Predicated region
    $region10: #{discriminator_forward.1} parent=1 // pred_check
      _
    $region11: #{discriminator_forward.1} parent=1 // pred_check_branch
      %31 = sbr.rel (0) target = $region13
    $region12: #{discriminator_forward.1} parent=1 // pred_region
      %33 = vsyncadd [#allocation6], 0
      %s34 = sshll.u32 %s2, 4
      %s35 = int_to_ptr.hbm [resolvable:$true] %s34
      %s36 = sshll.u32 [#allocation5], 4
      %s37 = int_to_ptr.vmem [resolvable:$true] %s36
      %42 = dma.hbm_to_vmem [thread:$0]  %s35, 12288, %s37, [#allocation6], 128, 128, 8
    $region13: #{discriminator_forward.1} parent=1 // pred_fallthru
      _
    // Predicated region
    $region14: #{discriminator_forward.1} parent=1 // pred_check
      _
    $region15: #{discriminator_forward.1} parent=1 // pred_check_branch
      %44 = sbr.rel (0) target = $region17
    $region16: #{discriminator_forward.1} parent=1 // pred_region
      _
    $region17: #{discriminator_forward.1} parent=1 // pred_fallthru
      _
    // Predicated region
    $region18: #{discriminator_forward.1} parent=1 // pred_check
      _
    $region19: #{discriminator_forward.1} parent=1 // pred_check_branch
      %46 = sbr.rel (0) target = $region21
    $region20: #{discriminator_forward.1} parent=1 // pred_region
      _
    $region21: #{discriminator_forward.1} parent=1 // pred_fallthru
      _
    // Predicated region
    $region22: #{discriminator_forward.1} parent=1 // pred_check
      _
    $region23: #{discriminator_forward.1} parent=1 // pred_check_branch
      %48 = sbr.rel (0) target = $region25
    $region24: #{discriminator_forward.1} parent=1 // pred_region
      _
    $region25: #{discriminator_forward.1} parent=1 // pred_fallthru
      _
    // Predicated region
    $region26: #{discriminator_forward.1} parent=1 // pred_check
      _
    $region27: #{discriminator_forward.1} parent=1 // pred_check_branch
      %50 = sbr.rel (0) target = $region29
    $region28: #{discriminator_forward.1} parent=1 // pred_region
      %52 = dma.done [#allocation4], 2048
    $region29: #{discriminator_forward.1} parent=1 // pred_fallthru
      _
    // Predicated region
    $region30: #{discriminator_forward.1} parent=1 // pred_check
      _
    $region31: #{discriminator_forward.1} parent=1 // pred_check_branch
      %54 = sbr.rel (0) target = $region33
    $region32: #{discriminator_forward.1} parent=1 // pred_region
      %56 = dma.done [#allocation6], 12288
    $region33: #{discriminator_forward.1} parent=1 // pred_fallthru
      _
    %v58 = vld [vmem:[%s0] sm:$0xf]
    %v59 = vld [vmem:[%s0 + $0x4] sm:$0xf]
    %v60 = vld [vmem:[%s3] sm:$0xff]
    %v61 = vld [vmem:[#allocation3] sm:$0xff]
    %v62 = vld [vmem:[#allocation3 + $0x8] sm:$0xff]
    %v63 = vld [vmem:[#allocation3 + $0x10] sm:$0xff]
    %v64 = vld [vmem:[#allocation3 + $0x18] sm:$0xff]
    %v65 = vld [vmem:[#allocation3 + $0x20] sm:$0xff]
    %v66 = vld [vmem:[#allocation3 + $0x28] sm:$0xff]
    %v67 = vld [vmem:[#allocation3 + $0x30] sm:$0xff]
    %v68 = vld [vmem:[#allocation3 + $0x38] sm:$0xff]
    %v69 = vld [vmem:[#allocation3 + $0x40] sm:$0xff]
    %v70 = vld [vmem:[#allocation3 + $0x48] sm:$0xff]
    %v71 = vld [vmem:[#allocation3 + $0x50] sm:$0xff]
    %v72 = vld [vmem:[#allocation3 + $0x58] sm:$0xff]
    %v73 = vld [vmem:[#allocation3 + $0x60] sm:$0xff]
    %v74 = vld [vmem:[#allocation3 + $0x68] sm:$0xff]
    %v75 = vld [vmem:[#allocation3 + $0x70] sm:$0xff]
    %v76 = vld [vmem:[#allocation3 + $0x78] sm:$0xff]
    %v78 = vperm.slane %v60, 0
    %v79 = vperm.slane %v60, 4
    %v82 = vperm.slane %v78, 0
    %v83 = vperm.slane %v79, 0
    %v86 = vunpack.c.l.b16 %v58
    %v87 = vunpack.c.l.b16 %v59
    %v88 = vpack.c.b16 %v87, %v86
    %v106 = vunpack.c.l.b16 %v61
    %v107 = vunpack.c.h.b16 %v61
    %v108 = vunpack.c.l.b16 %v62
    %v109 = vunpack.c.h.b16 %v62
    %v110 = vunpack.c.l.b16 %v63
    %v111 = vunpack.c.h.b16 %v63
    %v112 = vunpack.c.l.b16 %v64
    %v113 = vunpack.c.h.b16 %v64
    %v114 = vunpack.c.l.b16 %v65
    %v115 = vunpack.c.h.b16 %v65
    %v116 = vunpack.c.l.b16 %v66
    %v117 = vunpack.c.h.b16 %v66
    %v118 = vunpack.c.l.b16 %v67
    %v119 = vunpack.c.h.b16 %v67
    %v120 = vunpack.c.l.b16 %v68
    %v121 = vunpack.c.h.b16 %v68
    %v122 = vunpack.c.l.b16 %v69
    %v123 = vunpack.c.h.b16 %v69
    %v124 = vunpack.c.l.b16 %v70
    %v125 = vunpack.c.h.b16 %v70
    %v126 = vunpack.c.l.b16 %v71
    %v127 = vunpack.c.h.b16 %v71
    %v128 = vunpack.c.l.b16 %v72
    %v129 = vunpack.c.h.b16 %v72
    %v130 = vunpack.c.l.b16 %v73
    %v131 = vunpack.c.h.b16 %v73
    %v132 = vunpack.c.l.b16 %v74
    %v133 = vunpack.c.h.b16 %v74
    %v134 = vunpack.c.l.b16 %v75
    %v135 = vunpack.c.h.b16 %v75
    %v136 = vunpack.c.l.b16 %v76
    %v137 = vunpack.c.h.b16 %v76
    %v138 = vpack.c.b16 %v108, %v106
    %v139 = vpack.c.b16 %v109, %v107
    %v140 = vpack.c.b16 %v112, %v110
    %v141 = vpack.c.b16 %v113, %v111
    %v142 = vpack.c.b16 %v116, %v114
    %v143 = vpack.c.b16 %v117, %v115
    %v144 = vpack.c.b16 %v120, %v118
    %v145 = vpack.c.b16 %v121, %v119
    %v146 = vpack.c.b16 %v124, %v122
    %v147 = vpack.c.b16 %v125, %v123
    %v148 = vpack.c.b16 %v128, %v126
    %v149 = vpack.c.b16 %v129, %v127
    %v150 = vpack.c.b16 %v132, %v130
    %v151 = vpack.c.b16 %v133, %v131
    %v152 = vpack.c.b16 %v136, %v134
    %v153 = vpack.c.b16 %v137, %v135
    %170 = vmatpush.bf16.msra.mxu0 %v152
    %171 = vmatpush.bf16.msra.mxu0 %v150
    %172 = vmatpush.bf16.msra.mxu0 %v148
    %173 = vmatpush.bf16.msra.mxu0 %v146
    %174 = vmatpush.bf16.msra.mxu0 %v144
    %175 = vmatpush.bf16.msra.mxu0 %v142
    %176 = vmatpush.bf16.msra.mxu0 %v140
    %177 = vmatpush.bf16.msra.mxu0 %v138
    %178 = vmatmul.bf16.gmra.mxu0 %v88
    %v179 = vpop.f32.mrf.mxu0
    %v180 = vadd.f32 %v82, %v179
    %v181 = vpop.f32.mrf.mxu0
    %v182 = vadd.f32 %v82, %v181
    %183 = vdwg.mxu0
    %184 = vmatpush.bf16.msra.mxu0 %v153
    %185 = vmatpush.bf16.msra.mxu0 %v151
    %186 = vmatpush.bf16.msra.mxu0 %v149
    %187 = vmatpush.bf16.msra.mxu0 %v147
    %188 = vmatpush.bf16.msra.mxu0 %v145
    %189 = vmatpush.bf16.msra.mxu0 %v143
    %190 = vmatpush.bf16.msra.mxu0 %v141
    %191 = vmatpush.bf16.msra.mxu0 %v139
    %192 = vmatmul.bf16.gmra.mxu0 %v88
    %v193 = vpop.f32.mrf.mxu0
    %v194 = vadd.f32 %v83, %v193
    %v195 = vpop.f32.mrf.mxu0
    %v196 = vadd.f32 %v83, %v195
    %197 = vdwg.mxu0
    %v198 = vmax.f32 %v180, 0.0
    %v199 = vmax.f32 %v194, 0.0
    %v200 = vmax.f32 %v182, 0.0
    %v201 = vmax.f32 %v196, 0.0
    %v202 = vpack.c.bf16 %v200, %v198
    %v203 = vpack.c.bf16 %v201, %v199
    %v204 = vld [vmem:[#allocation5] sm:$0xff]
    %v205 = vld [vmem:[#allocation5 + $0x8] sm:$0xff]
    %v206 = vld [vmem:[#allocation5 + $0x10] sm:$0xff]
    %v207 = vld [vmem:[#allocation5 + $0x18] sm:$0xff]
    %v208 = vld [vmem:[#allocation5 + $0x20] sm:$0xff]
    %v209 = vld [vmem:[#allocation5 + $0x28] sm:$0xff]
    %v210 = vld [vmem:[#allocation5 + $0x30] sm:$0xff]
    %v211 = vld [vmem:[#allocation5 + $0x38] sm:$0xff]
    %v212 = vld [vmem:[#allocation5 + $0x40] sm:$0xff]
    %v213 = vld [vmem:[#allocation5 + $0x48] sm:$0xff]
    %v214 = vld [vmem:[#allocation5 + $0x50] sm:$0xff]
    %v215 = vld [vmem:[#allocation5 + $0x58] sm:$0xff]
    %v216 = vld [vmem:[#allocation5 + $0x60] sm:$0xff]
    %v217 = vld [vmem:[#allocation5 + $0x68] sm:$0xff]
    %v218 = vld [vmem:[#allocation5 + $0x70] sm:$0xff]
    %v219 = vld [vmem:[#allocation5 + $0x78] sm:$0xff]
    %v220 = vld [vmem:[#allocation5 + $0x80] sm:$0xff]
    %v221 = vld [vmem:[#allocation5 + $0x88] sm:$0xff]
    %v222 = vld [vmem:[#allocation5 + $0x90] sm:$0xff]
    %v223 = vld [vmem:[#allocation5 + $0x98] sm:$0xff]
    %v224 = vld [vmem:[#allocation5 + $0xa0] sm:$0xff]
    %v225 = vld [vmem:[#allocation5 + $0xa8] sm:$0xff]
    %v226 = vld [vmem:[#allocation5 + $0xb0] sm:$0xff]
    %v227 = vld [vmem:[#allocation5 + $0xb8] sm:$0xff]
    %v228 = vld [vmem:[#allocation5 + $0xc0] sm:$0xff]
    %v229 = vld [vmem:[#allocation5 + $0xc8] sm:$0xff]
    %v230 = vld [vmem:[#allocation5 + $0xd0] sm:$0xff]
    %v231 = vld [vmem:[#allocation5 + $0xd8] sm:$0xff]
    %v232 = vld [vmem:[#allocation5 + $0xe0] sm:$0xff]
    %v233 = vld [vmem:[#allocation5 + $0xe8] sm:$0xff]
    %v234 = vld [vmem:[#allocation5 + $0xf0] sm:$0xff]
    %v235 = vld [vmem:[#allocation5 + $0xf8] sm:$0xff]
    %v236 = vperm.slane %v60, 1
    %v237 = vperm.slane %v60, 5
    %v240 = vperm.slane %v236, 1
    %v241 = vperm.slane %v237, 1
    %v274 = vunpack.c.l.b16 %v204
    %v275 = vunpack.c.h.b16 %v204
    %v276 = vunpack.c.l.b16 %v205
    %v277 = vunpack.c.h.b16 %v205
    %v278 = vunpack.c.l.b16 %v206
    %v279 = vunpack.c.h.b16 %v206
    %v280 = vunpack.c.l.b16 %v207
    %v281 = vunpack.c.h.b16 %v207
    %v282 = vunpack.c.l.b16 %v208
    %v283 = vunpack.c.h.b16 %v208
    %v284 = vunpack.c.l.b16 %v209
    %v285 = vunpack.c.h.b16 %v209
    %v286 = vunpack.c.l.b16 %v210
    %v287 = vunpack.c.h.b16 %v210
    %v288 = vunpack.c.l.b16 %v211
    %v289 = vunpack.c.h.b16 %v211
    %v290 = vunpack.c.l.b16 %v212
    %v291 = vunpack.c.h.b16 %v212
    %v292 = vunpack.c.l.b16 %v213
    %v293 = vunpack.c.h.b16 %v213
    %v294 = vunpack.c.l.b16 %v214
    %v295 = vunpack.c.h.b16 %v214
    %v296 = vunpack.c.l.b16 %v215
    %v297 = vunpack.c.h.b16 %v215
    %v298 = vunpack.c.l.b16 %v216
    %v299 = vunpack.c.h.b16 %v216
    %v300 = vunpack.c.l.b16 %v217
    %v301 = vunpack.c.h.b16 %v217
    %v302 = vunpack.c.l.b16 %v218
    %v303 = vunpack.c.h.b16 %v218
    %v304 = vunpack.c.l.b16 %v219
    %v305 = vunpack.c.h.b16 %v219
    %v306 = vunpack.c.l.b16 %v220
    %v307 = vunpack.c.h.b16 %v220
    %v308 = vunpack.c.l.b16 %v221
    %v309 = vunpack.c.h.b16 %v221
    %v310 = vunpack.c.l.b16 %v222
    %v311 = vunpack.c.h.b16 %v222
    %v312 = vunpack.c.l.b16 %v223
    %v313 = vunpack.c.h.b16 %v223
    %v314 = vunpack.c.l.b16 %v224
    %v315 = vunpack.c.h.b16 %v224
    %v316 = vunpack.c.l.b16 %v225
    %v317 = vunpack.c.h.b16 %v225
    %v318 = vunpack.c.l.b16 %v226
    %v319 = vunpack.c.h.b16 %v226
    %v320 = vunpack.c.l.b16 %v227
    %v321 = vunpack.c.h.b16 %v227
    %v322 = vunpack.c.l.b16 %v228
    %v323 = vunpack.c.h.b16 %v228
    %v324 = vunpack.c.l.b16 %v229
    %v325 = vunpack.c.h.b16 %v229
    %v326 = vunpack.c.l.b16 %v230
    %v327 = vunpack.c.h.b16 %v230
    %v328 = vunpack.c.l.b16 %v231
    %v329 = vunpack.c.h.b16 %v231
    %v330 = vunpack.c.l.b16 %v232
    %v331 = vunpack.c.h.b16 %v232
    %v332 = vunpack.c.l.b16 %v233
    %v333 = vunpack.c.h.b16 %v233
    %v334 = vunpack.c.l.b16 %v234
    %v335 = vunpack.c.h.b16 %v234
    %v336 = vunpack.c.l.b16 %v235
    %v337 = vunpack.c.h.b16 %v235
    %v338 = vpack.c.b16 %v276, %v274
    %v339 = vpack.c.b16 %v277, %v275
    %v340 = vpack.c.b16 %v280, %v278
    %v341 = vpack.c.b16 %v281, %v279
    %v342 = vpack.c.b16 %v284, %v282
    %v343 = vpack.c.b16 %v285, %v283
    %v344 = vpack.c.b16 %v288, %v286
    %v345 = vpack.c.b16 %v289, %v287
    %v346 = vpack.c.b16 %v292, %v290
    %v347 = vpack.c.b16 %v293, %v291
    %v348 = vpack.c.b16 %v296, %v294
    %v349 = vpack.c.b16 %v297, %v295
    %v350 = vpack.c.b16 %v300, %v298
    %v351 = vpack.c.b16 %v301, %v299
    %v352 = vpack.c.b16 %v304, %v302
    %v353 = vpack.c.b16 %v305, %v303
    %v354 = vpack.c.b16 %v308, %v306
    %v355 = vpack.c.b16 %v309, %v307
    %v356 = vpack.c.b16 %v312, %v310
    %v357 = vpack.c.b16 %v313, %v311
    %v358 = vpack.c.b16 %v316, %v314
    %v359 = vpack.c.b16 %v317, %v315
    %v360 = vpack.c.b16 %v320, %v318
    %v361 = vpack.c.b16 %v321, %v319
    %v362 = vpack.c.b16 %v324, %v322
    %v363 = vpack.c.b16 %v325, %v323
    %v364 = vpack.c.b16 %v328, %v326
    %v365 = vpack.c.b16 %v329, %v327
    %v366 = vpack.c.b16 %v332, %v330
    %v367 = vpack.c.b16 %v333, %v331
    %v368 = vpack.c.b16 %v336, %v334
    %v369 = vpack.c.b16 %v337, %v335
    %402 = vmatpush.bf16.msra.mxu0 %v352
    %403 = vmatpush.bf16.msra.mxu0 %v350
    %404 = vmatpush.bf16.msra.mxu0 %v348
    %405 = vmatpush.bf16.msra.mxu0 %v346
    %406 = vmatpush.bf16.msra.mxu0 %v344
    %407 = vmatpush.bf16.msra.mxu0 %v342
    %408 = vmatpush.bf16.msra.mxu0 %v340
    %409 = vmatpush.bf16.msra.mxu0 %v338
    %410 = vmatmul.bf16.gmra.mxu0 %v202
    %v411 = vpop.f32.mrf.mxu0
    %v412 = vadd.f32 %v240, %v411
    %v413 = vpop.f32.mrf.mxu0
    %v414 = vadd.f32 %v240, %v413
    %415 = vdwg.mxu0
    %416 = vmatpush.bf16.msra.mxu0 %v368
    %417 = vmatpush.bf16.msra.mxu0 %v366
    %418 = vmatpush.bf16.msra.mxu0 %v364
    %419 = vmatpush.bf16.msra.mxu0 %v362
    %420 = vmatpush.bf16.msra.mxu0 %v360
    %421 = vmatpush.bf16.msra.mxu0 %v358
    %422 = vmatpush.bf16.msra.mxu0 %v356
    %423 = vmatpush.bf16.msra.mxu0 %v354
    %424 = vmatmul.bf16.gmra.mxu0 %v203
    %v425 = vpop.f32.mrf.mxu0
    %v426 = vadd.f32 %v412, %v425
    %v427 = vpop.f32.mrf.mxu0
    %v428 = vadd.f32 %v414, %v427
    %429 = vdwg.mxu0
    %430 = vmatpush.bf16.msra.mxu0 %v353
    %431 = vmatpush.bf16.msra.mxu0 %v351
    %432 = vmatpush.bf16.msra.mxu0 %v349
    %433 = vmatpush.bf16.msra.mxu0 %v347
    %434 = vmatpush.bf16.msra.mxu0 %v345
    %435 = vmatpush.bf16.msra.mxu0 %v343
    %436 = vmatpush.bf16.msra.mxu0 %v341
    %437 = vmatpush.bf16.msra.mxu0 %v339
    %438 = vmatmul.bf16.gmra.mxu0 %v202
    %v439 = vpop.f32.mrf.mxu0
    %v440 = vadd.f32 %v241, %v439
    %v441 = vpop.f32.mrf.mxu0
    %v442 = vadd.f32 %v241, %v441
    %443 = vdwg.mxu0
    %444 = vmatpush.bf16.msra.mxu0 %v369
    %445 = vmatpush.bf16.msra.mxu0 %v367
    %446 = vmatpush.bf16.msra.mxu0 %v365
    %447 = vmatpush.bf16.msra.mxu0 %v363
    %448 = vmatpush.bf16.msra.mxu0 %v361
    %449 = vmatpush.bf16.msra.mxu0 %v359
    %450 = vmatpush.bf16.msra.mxu0 %v357
    %451 = vmatpush.bf16.msra.mxu0 %v355
    %452 = vmatmul.bf16.gmra.mxu0 %v203
    %v453 = vpop.f32.mrf.mxu0
    %v454 = vadd.f32 %v440, %v453
    %v455 = vpop.f32.mrf.mxu0
    %v456 = vadd.f32 %v442, %v455
    %457 = vdwg.mxu0
    %v458 = vmax.f32 %v426, 0.0
    %v459 = vmax.f32 %v454, 0.0
    %v460 = vmax.f32 %v428, 0.0
    %v461 = vmax.f32 %v456, 0.0
    %v462 = vpack.c.bf16 %v460, %v458
    %v463 = vpack.c.bf16 %v461, %v459
    %s464 = scalar_lea.vmem [#allocation5], 256
    %v465 = vld [vmem:[%s464] sm:$0xff]
    %v466 = vld [vmem:[%s464 + $0x8] sm:$0xff]
    %v467 = vld [vmem:[%s464 + $0x10] sm:$0xff]
    %v468 = vld [vmem:[%s464 + $0x18] sm:$0xff]
    %v469 = vld [vmem:[%s464 + $0x20] sm:$0xff]
    %v470 = vld [vmem:[%s464 + $0x28] sm:$0xff]
    %v471 = vld [vmem:[%s464 + $0x30] sm:$0xff]
    %v472 = vld [vmem:[%s464 + $0x38] sm:$0xff]
    %v473 = vld [vmem:[%s464 + $0x40] sm:$0xff]
    %v474 = vld [vmem:[%s464 + $0x48] sm:$0xff]
    %v475 = vld [vmem:[%s464 + $0x50] sm:$0xff]
    %v476 = vld [vmem:[%s464 + $0x58] sm:$0xff]
    %v477 = vld [vmem:[%s464 + $0x60] sm:$0xff]
    %v478 = vld [vmem:[%s464 + $0x68] sm:$0xff]
    %v479 = vld [vmem:[%s464 + $0x70] sm:$0xff]
    %v480 = vld [vmem:[%s464 + $0x78] sm:$0xff]
    %v481 = vld [vmem:[%s464 + $0x80] sm:$0xff]
    %v482 = vld [vmem:[%s464 + $0x88] sm:$0xff]
    %v483 = vld [vmem:[%s464 + $0x90] sm:$0xff]
    %v484 = vld [vmem:[%s464 + $0x98] sm:$0xff]
    %v485 = vld [vmem:[%s464 + $0xa0] sm:$0xff]
    %v486 = vld [vmem:[%s464 + $0xa8] sm:$0xff]
    %v487 = vld [vmem:[%s464 + $0xb0] sm:$0xff]
    %v488 = vld [vmem:[%s464 + $0xb8] sm:$0xff]
    %v489 = vld [vmem:[%s464 + $0xc0] sm:$0xff]
    %v490 = vld [vmem:[%s464 + $0xc8] sm:$0xff]
    %v491 = vld [vmem:[%s464 + $0xd0] sm:$0xff]
    %v492 = vld [vmem:[%s464 + $0xd8] sm:$0xff]
    %v493 = vld [vmem:[%s464 + $0xe0] sm:$0xff]
    %v494 = vld [vmem:[%s464 + $0xe8] sm:$0xff]
    %v495 = vld [vmem:[%s464 + $0xf0] sm:$0xff]
    %v496 = vld [vmem:[%s464 + $0xf8] sm:$0xff]
    %v497 = vperm.slane %v60, 2
    %v498 = vperm.slane %v60, 6
    %v501 = vperm.slane %v497, 2
    %v502 = vperm.slane %v498, 2
    %v535 = vunpack.c.l.b16 %v465
    %v536 = vunpack.c.h.b16 %v465
    %v537 = vunpack.c.l.b16 %v466
    %v538 = vunpack.c.h.b16 %v466
    %v539 = vunpack.c.l.b16 %v467
    %v540 = vunpack.c.h.b16 %v467
    %v541 = vunpack.c.l.b16 %v468
    %v542 = vunpack.c.h.b16 %v468
    %v543 = vunpack.c.l.b16 %v469
    %v544 = vunpack.c.h.b16 %v469
    %v545 = vunpack.c.l.b16 %v470
    %v546 = vunpack.c.h.b16 %v470
    %v547 = vunpack.c.l.b16 %v471
    %v548 = vunpack.c.h.b16 %v471
    %v549 = vunpack.c.l.b16 %v472
    %v550 = vunpack.c.h.b16 %v472
    %v551 = vunpack.c.l.b16 %v473
    %v552 = vunpack.c.h.b16 %v473
    %v553 = vunpack.c.l.b16 %v474
    %v554 = vunpack.c.h.b16 %v474
    %v555 = vunpack.c.l.b16 %v475
    %v556 = vunpack.c.h.b16 %v475
    %v557 = vunpack.c.l.b16 %v476
    %v558 = vunpack.c.h.b16 %v476
    %v559 = vunpack.c.l.b16 %v477
    %v560 = vunpack.c.h.b16 %v477
    %v561 = vunpack.c.l.b16 %v478
    %v562 = vunpack.c.h.b16 %v478
    %v563 = vunpack.c.l.b16 %v479
    %v564 = vunpack.c.h.b16 %v479
    %v565 = vunpack.c.l.b16 %v480
    %v566 = vunpack.c.h.b16 %v480
    %v567 = vunpack.c.l.b16 %v481
    %v568 = vunpack.c.h.b16 %v481
    %v569 = vunpack.c.l.b16 %v482
    %v570 = vunpack.c.h.b16 %v482
    %v571 = vunpack.c.l.b16 %v483
    %v572 = vunpack.c.h.b16 %v483
    %v573 = vunpack.c.l.b16 %v484
    %v574 = vunpack.c.h.b16 %v484
    %v575 = vunpack.c.l.b16 %v485
    %v576 = vunpack.c.h.b16 %v485
    %v577 = vunpack.c.l.b16 %v486
    %v578 = vunpack.c.h.b16 %v486
    %v579 = vunpack.c.l.b16 %v487
    %v580 = vunpack.c.h.b16 %v487
    %v581 = vunpack.c.l.b16 %v488
    %v582 = vunpack.c.h.b16 %v488
    %v583 = vunpack.c.l.b16 %v489
    %v584 = vunpack.c.h.b16 %v489
    %v585 = vunpack.c.l.b16 %v490
    %v586 = vunpack.c.h.b16 %v490
    %v587 = vunpack.c.l.b16 %v491
    %v588 = vunpack.c.h.b16 %v491
    %v589 = vunpack.c.l.b16 %v492
    %v590 = vunpack.c.h.b16 %v492
    %v591 = vunpack.c.l.b16 %v493
    %v592 = vunpack.c.h.b16 %v493
    %v593 = vunpack.c.l.b16 %v494
    %v594 = vunpack.c.h.b16 %v494
    %v595 = vunpack.c.l.b16 %v495
    %v596 = vunpack.c.h.b16 %v495
    %v597 = vunpack.c.l.b16 %v496
    %v598 = vunpack.c.h.b16 %v496
    %v599 = vpack.c.b16 %v537, %v535
    %v600 = vpack.c.b16 %v538, %v536
    %v601 = vpack.c.b16 %v541, %v539
    %v602 = vpack.c.b16 %v542, %v540
    %v603 = vpack.c.b16 %v545, %v543
    %v604 = vpack.c.b16 %v546, %v544
    %v605 = vpack.c.b16 %v549, %v547
    %v606 = vpack.c.b16 %v550, %v548
    %v607 = vpack.c.b16 %v553, %v551
    %v608 = vpack.c.b16 %v554, %v552
    %v609 = vpack.c.b16 %v557, %v555
    %v610 = vpack.c.b16 %v558, %v556
    %v611 = vpack.c.b16 %v561, %v559
    %v612 = vpack.c.b16 %v562, %v560
    %v613 = vpack.c.b16 %v565, %v563
    %v614 = vpack.c.b16 %v566, %v564
    %v615 = vpack.c.b16 %v569, %v567
    %v616 = vpack.c.b16 %v570, %v568
    %v617 = vpack.c.b16 %v573, %v571
    %v618 = vpack.c.b16 %v574, %v572
    %v619 = vpack.c.b16 %v577, %v575
    %v620 = vpack.c.b16 %v578, %v576
    %v621 = vpack.c.b16 %v581, %v579
    %v622 = vpack.c.b16 %v582, %v580
    %v623 = vpack.c.b16 %v585, %v583
    %v624 = vpack.c.b16 %v586, %v584
    %v625 = vpack.c.b16 %v589, %v587
    %v626 = vpack.c.b16 %v590, %v588
    %v627 = vpack.c.b16 %v593, %v591
    %v628 = vpack.c.b16 %v594, %v592
    %v629 = vpack.c.b16 %v597, %v595
    %v630 = vpack.c.b16 %v598, %v596
    %663 = vmatpush.bf16.msra.mxu0 %v613
    %664 = vmatpush.bf16.msra.mxu0 %v611
    %665 = vmatpush.bf16.msra.mxu0 %v609
    %666 = vmatpush.bf16.msra.mxu0 %v607
    %667 = vmatpush.bf16.msra.mxu0 %v605
    %668 = vmatpush.bf16.msra.mxu0 %v603
    %669 = vmatpush.bf16.msra.mxu0 %v601
    %670 = vmatpush.bf16.msra.mxu0 %v599
    %671 = vmatmul.bf16.gmra.mxu0 %v462
    %v672 = vpop.f32.mrf.mxu0
    %v673 = vadd.f32 %v501, %v672
    %v674 = vpop.f32.mrf.mxu0
    %v675 = vadd.f32 %v501, %v674
    %676 = vdwg.mxu0
    %677 = vmatpush.bf16.msra.mxu0 %v629
    %678 = vmatpush.bf16.msra.mxu0 %v627
    %679 = vmatpush.bf16.msra.mxu0 %v625
    %680 = vmatpush.bf16.msra.mxu0 %v623
    %681 = vmatpush.bf16.msra.mxu0 %v621
    %682 = vmatpush.bf16.msra.mxu0 %v619
    %683 = vmatpush.bf16.msra.mxu0 %v617
    %684 = vmatpush.bf16.msra.mxu0 %v615
    %685 = vmatmul.bf16.gmra.mxu0 %v463
    %v686 = vpop.f32.mrf.mxu0
    %v687 = vadd.f32 %v673, %v686
    %v688 = vpop.f32.mrf.mxu0
    %v689 = vadd.f32 %v675, %v688
    %690 = vdwg.mxu0
    %691 = vmatpush.bf16.msra.mxu0 %v614
    %692 = vmatpush.bf16.msra.mxu0 %v612
    %693 = vmatpush.bf16.msra.mxu0 %v610
    %694 = vmatpush.bf16.msra.mxu0 %v608
    %695 = vmatpush.bf16.msra.mxu0 %v606
    %696 = vmatpush.bf16.msra.mxu0 %v604
    %697 = vmatpush.bf16.msra.mxu0 %v602
    %698 = vmatpush.bf16.msra.mxu0 %v600
    %699 = vmatmul.bf16.gmra.mxu0 %v462
    %v700 = vpop.f32.mrf.mxu0
    %v701 = vadd.f32 %v502, %v700
    %v702 = vpop.f32.mrf.mxu0
    %v703 = vadd.f32 %v502, %v702
    %704 = vdwg.mxu0
    %705 = vmatpush.bf16.msra.mxu0 %v630
    %706 = vmatpush.bf16.msra.mxu0 %v628
    %707 = vmatpush.bf16.msra.mxu0 %v626
    %708 = vmatpush.bf16.msra.mxu0 %v624
    %709 = vmatpush.bf16.msra.mxu0 %v622
    %710 = vmatpush.bf16.msra.mxu0 %v620
    %711 = vmatpush.bf16.msra.mxu0 %v618
    %712 = vmatpush.bf16.msra.mxu0 %v616
    %713 = vmatmul.bf16.gmra.mxu0 %v463
    %v714 = vpop.f32.mrf.mxu0
    %v715 = vadd.f32 %v701, %v714
    %v716 = vpop.f32.mrf.mxu0
    %v717 = vadd.f32 %v703, %v716
    %718 = vdwg.mxu0
    %v719 = vmax.f32 %v687, 0.0
    %v720 = vmax.f32 %v715, 0.0
    %v721 = vmax.f32 %v689, 0.0
    %v722 = vmax.f32 %v717, 0.0
    %v723 = vpack.c.bf16 %v721, %v719
    %v724 = vpack.c.bf16 %v722, %v720
    %s725 = scalar_lea.vmem [#allocation5], 512
    %v726 = vld [vmem:[%s725] sm:$0xff]
    %v727 = vld [vmem:[%s725 + $0x8] sm:$0xff]
    %v728 = vld [vmem:[%s725 + $0x10] sm:$0xff]
    %v729 = vld [vmem:[%s725 + $0x18] sm:$0xff]
    %v730 = vld [vmem:[%s725 + $0x20] sm:$0xff]
    %v731 = vld [vmem:[%s725 + $0x28] sm:$0xff]
    %v732 = vld [vmem:[%s725 + $0x30] sm:$0xff]
    %v733 = vld [vmem:[%s725 + $0x38] sm:$0xff]
    %v734 = vld [vmem:[%s725 + $0x40] sm:$0xff]
    %v735 = vld [vmem:[%s725 + $0x48] sm:$0xff]
    %v736 = vld [vmem:[%s725 + $0x50] sm:$0xff]
    %v737 = vld [vmem:[%s725 + $0x58] sm:$0xff]
    %v738 = vld [vmem:[%s725 + $0x60] sm:$0xff]
    %v739 = vld [vmem:[%s725 + $0x68] sm:$0xff]
    %v740 = vld [vmem:[%s725 + $0x70] sm:$0xff]
    %v741 = vld [vmem:[%s725 + $0x78] sm:$0xff]
    %v742 = vld [vmem:[%s725 + $0x80] sm:$0xff]
    %v743 = vld [vmem:[%s725 + $0x88] sm:$0xff]
    %v744 = vld [vmem:[%s725 + $0x90] sm:$0xff]
    %v745 = vld [vmem:[%s725 + $0x98] sm:$0xff]
    %v746 = vld [vmem:[%s725 + $0xa0] sm:$0xff]
    %v747 = vld [vmem:[%s725 + $0xa8] sm:$0xff]
    %v748 = vld [vmem:[%s725 + $0xb0] sm:$0xff]
    %v749 = vld [vmem:[%s725 + $0xb8] sm:$0xff]
    %v750 = vld [vmem:[%s725 + $0xc0] sm:$0xff]
    %v751 = vld [vmem:[%s725 + $0xc8] sm:$0xff]
    %v752 = vld [vmem:[%s725 + $0xd0] sm:$0xff]
    %v753 = vld [vmem:[%s725 + $0xd8] sm:$0xff]
    %v754 = vld [vmem:[%s725 + $0xe0] sm:$0xff]
    %v755 = vld [vmem:[%s725 + $0xe8] sm:$0xff]
    %v756 = vld [vmem:[%s725 + $0xf0] sm:$0xff]
    %v757 = vld [vmem:[%s725 + $0xf8] sm:$0xff]
    %v758 = vperm.slane %v60, 3
    %v759 = vperm.slane %v60, 7
    %v762 = vperm.slane %v758, 3
    %v763 = vperm.slane %v759, 3
    %v796 = vunpack.c.l.b16 %v726
    %v797 = vunpack.c.h.b16 %v726
    %v798 = vunpack.c.l.b16 %v727
    %v799 = vunpack.c.h.b16 %v727
    %v800 = vunpack.c.l.b16 %v728
    %v801 = vunpack.c.h.b16 %v728
    %v802 = vunpack.c.l.b16 %v729
    %v803 = vunpack.c.h.b16 %v729
    %v804 = vunpack.c.l.b16 %v730
    %v805 = vunpack.c.h.b16 %v730
    %v806 = vunpack.c.l.b16 %v731
    %v807 = vunpack.c.h.b16 %v731
    %v808 = vunpack.c.l.b16 %v732
    %v809 = vunpack.c.h.b16 %v732
    %v810 = vunpack.c.l.b16 %v733
    %v811 = vunpack.c.h.b16 %v733
    %v812 = vunpack.c.l.b16 %v734
    %v813 = vunpack.c.h.b16 %v734
    %v814 = vunpack.c.l.b16 %v735
    %v815 = vunpack.c.h.b16 %v735
    %v816 = vunpack.c.l.b16 %v736
    %v817 = vunpack.c.h.b16 %v736
    %v818 = vunpack.c.l.b16 %v737
    %v819 = vunpack.c.h.b16 %v737
    %v820 = vunpack.c.l.b16 %v738
    %v821 = vunpack.c.h.b16 %v738
    %v822 = vunpack.c.l.b16 %v739
    %v823 = vunpack.c.h.b16 %v739
    %v824 = vunpack.c.l.b16 %v740
    %v825 = vunpack.c.h.b16 %v740
    %v826 = vunpack.c.l.b16 %v741
    %v827 = vunpack.c.h.b16 %v741
    %v828 = vunpack.c.l.b16 %v742
    %v829 = vunpack.c.h.b16 %v742
    %v830 = vunpack.c.l.b16 %v743
    %v831 = vunpack.c.h.b16 %v743
    %v832 = vunpack.c.l.b16 %v744
    %v833 = vunpack.c.h.b16 %v744
    %v834 = vunpack.c.l.b16 %v745
    %v835 = vunpack.c.h.b16 %v745
    %v836 = vunpack.c.l.b16 %v746
    %v837 = vunpack.c.h.b16 %v746
    %v838 = vunpack.c.l.b16 %v747
    %v839 = vunpack.c.h.b16 %v747
    %v840 = vunpack.c.l.b16 %v748
    %v841 = vunpack.c.h.b16 %v748
    %v842 = vunpack.c.l.b16 %v749
    %v843 = vunpack.c.h.b16 %v749
    %v844 = vunpack.c.l.b16 %v750
    %v845 = vunpack.c.h.b16 %v750
    %v846 = vunpack.c.l.b16 %v751
    %v847 = vunpack.c.h.b16 %v751
    %v848 = vunpack.c.l.b16 %v752
    %v849 = vunpack.c.h.b16 %v752
    %v850 = vunpack.c.l.b16 %v753
    %v851 = vunpack.c.h.b16 %v753
    %v852 = vunpack.c.l.b16 %v754
    %v853 = vunpack.c.h.b16 %v754
    %v854 = vunpack.c.l.b16 %v755
    %v855 = vunpack.c.h.b16 %v755
    %v856 = vunpack.c.l.b16 %v756
    %v857 = vunpack.c.h.b16 %v756
    %v858 = vunpack.c.l.b16 %v757
    %v859 = vunpack.c.h.b16 %v757
    %v860 = vpack.c.b16 %v798, %v796
    %v861 = vpack.c.b16 %v799, %v797
    %v862 = vpack.c.b16 %v802, %v800
    %v863 = vpack.c.b16 %v803, %v801
    %v864 = vpack.c.b16 %v806, %v804
    %v865 = vpack.c.b16 %v807, %v805
    %v866 = vpack.c.b16 %v810, %v808
    %v867 = vpack.c.b16 %v811, %v809
    %v868 = vpack.c.b16 %v814, %v812
    %v869 = vpack.c.b16 %v815, %v813
    %v870 = vpack.c.b16 %v818, %v816
    %v871 = vpack.c.b16 %v819, %v817
    %v872 = vpack.c.b16 %v822, %v820
    %v873 = vpack.c.b16 %v823, %v821
    %v874 = vpack.c.b16 %v826, %v824
    %v875 = vpack.c.b16 %v827, %v825
    %v876 = vpack.c.b16 %v830, %v828
    %v877 = vpack.c.b16 %v831, %v829
    %v878 = vpack.c.b16 %v834, %v832
    %v879 = vpack.c.b16 %v835, %v833
    %v880 = vpack.c.b16 %v838, %v836
    %v881 = vpack.c.b16 %v839, %v837
    %v882 = vpack.c.b16 %v842, %v840
    %v883 = vpack.c.b16 %v843, %v841
    %v884 = vpack.c.b16 %v846, %v844
    %v885 = vpack.c.b16 %v847, %v845
    %v886 = vpack.c.b16 %v850, %v848
    %v887 = vpack.c.b16 %v851, %v849
    %v888 = vpack.c.b16 %v854, %v852
    %v889 = vpack.c.b16 %v855, %v853
    %v890 = vpack.c.b16 %v858, %v856
    %v891 = vpack.c.b16 %v859, %v857
    %924 = vmatpush.bf16.msra.mxu0 %v874
    %925 = vmatpush.bf16.msra.mxu0 %v872
    %926 = vmatpush.bf16.msra.mxu0 %v870
    %927 = vmatpush.bf16.msra.mxu0 %v868
    %928 = vmatpush.bf16.msra.mxu0 %v866
    %929 = vmatpush.bf16.msra.mxu0 %v864
    %930 = vmatpush.bf16.msra.mxu0 %v862
    %931 = vmatpush.bf16.msra.mxu0 %v860
    %932 = vmatmul.bf16.gmra.mxu0 %v723
    %v933 = vpop.f32.mrf.mxu0
    %v934 = vadd.f32 %v762, %v933
    %v935 = vpop.f32.mrf.mxu0
    %v936 = vadd.f32 %v762, %v935
    %937 = vdwg.mxu0
    %938 = vmatpush.bf16.msra.mxu0 %v890
    %939 = vmatpush.bf16.msra.mxu0 %v888
    %940 = vmatpush.bf16.msra.mxu0 %v886
    %941 = vmatpush.bf16.msra.mxu0 %v884
    %942 = vmatpush.bf16.msra.mxu0 %v882
    %943 = vmatpush.bf16.msra.mxu0 %v880
    %944 = vmatpush.bf16.msra.mxu0 %v878
    %945 = vmatpush.bf16.msra.mxu0 %v876
    %946 = vmatmul.bf16.gmra.mxu0 %v724
    %v947 = vpop.f32.mrf.mxu0
    %v948 = vadd.f32 %v934, %v947
    %v949 = vpop.f32.mrf.mxu0
    %v950 = vadd.f32 %v936, %v949
    %951 = vdwg.mxu0
    %952 = vmatpush.bf16.msra.mxu0 %v875
    %953 = vmatpush.bf16.msra.mxu0 %v873
    %954 = vmatpush.bf16.msra.mxu0 %v871
    %955 = vmatpush.bf16.msra.mxu0 %v869
    %956 = vmatpush.bf16.msra.mxu0 %v867
    %957 = vmatpush.bf16.msra.mxu0 %v865
    %958 = vmatpush.bf16.msra.mxu0 %v863
    %959 = vmatpush.bf16.msra.mxu0 %v861
    %960 = vmatmul.bf16.gmra.mxu0 %v723
    %v961 = vpop.f32.mrf.mxu0
    %v962 = vadd.f32 %v763, %v961
    %v963 = vpop.f32.mrf.mxu0
    %v964 = vadd.f32 %v763, %v963
    %965 = vdwg.mxu0
    %966 = vmatpush.bf16.msra.mxu0 %v891
    %967 = vmatpush.bf16.msra.mxu0 %v889
    %968 = vmatpush.bf16.msra.mxu0 %v887
    %969 = vmatpush.bf16.msra.mxu0 %v885
    %970 = vmatpush.bf16.msra.mxu0 %v883
    %971 = vmatpush.bf16.msra.mxu0 %v881
    %972 = vmatpush.bf16.msra.mxu0 %v879
    %973 = vmatpush.bf16.msra.mxu0 %v877
    %974 = vmatmul.bf16.gmra.mxu0 %v724
    %v975 = vpop.f32.mrf.mxu0
    %v976 = vadd.f32 %v962, %v975
    %v977 = vpop.f32.mrf.mxu0
    %v978 = vadd.f32 %v964, %v977
    %979 = vdwg.mxu0
    %v980 = vmax.f32 %v948, 0.0
    %v981 = vmax.f32 %v976, 0.0
    %v982 = vmax.f32 %v950, 0.0
    %v983 = vmax.f32 %v978, 0.0
    %v984 = vpack.c.bf16 %v982, %v980
    %v985 = vpack.c.bf16 %v983, %v981
    %v986 = vld [vmem:[%s4] sm:$0xff]
    %v988 = vunpack.c.l.b16 %v986
    %v989 = vunpack.c.h.b16 %v986
    %v990 = vpack.c.b16 %v988, %v988
    %v991 = vpack.c.b16 %v989, %v989
    %994 = vmatpush.bf16.xpose.msra.mxu0 0
    %995 = vmatpush.bf16.xpose.msra.mxu0 0
    %996 = vmatpush.bf16.xpose.msra.mxu0 0
    %997 = vmatpush.bf16.xpose.msra.mxu0 0
    %998 = vmatpush.bf16.xpose.msra.mxu0 0
    %999 = vmatpush.bf16.xpose.msra.mxu0 0
    %1000 = vmatpush.bf16.xpose.msra.mxu0 0
    %1001 = vmatpush.bf16.xpose.msra.mxu0 %v984
    %1002 = vmatmul.bf16.gmra.mxu0 %v990
    %v1003 = vpop.f32.mrf.mxu0
    %v1004 = vadd.f32 0.0, %v1003
    %v1005 = vpop.f32.mrf.mxu0
    %1006 = vdwg.mxu0
    %1007 = vmatpush.bf16.xpose.msra.mxu0 0
    %1008 = vmatpush.bf16.xpose.msra.mxu0 0
    %1009 = vmatpush.bf16.xpose.msra.mxu0 0
    %1010 = vmatpush.bf16.xpose.msra.mxu0 0
    %1011 = vmatpush.bf16.xpose.msra.mxu0 0
    %1012 = vmatpush.bf16.xpose.msra.mxu0 0
    %1013 = vmatpush.bf16.xpose.msra.mxu0 0
    %1014 = vmatpush.bf16.xpose.msra.mxu0 %v985
    %1015 = vmatmul.bf16.gmra.mxu0 %v991
    %v1016 = vpop.f32.mrf.mxu0
    %v1017 = vadd.f32 %v1004, %v1016
    %v1018 = vpop.f32.mrf.mxu0
    %1019 = vdwg.mxu0
    %v1020 = vld [vmem:[#allocation2] sm:$0x1]
    %1022 = vset.pattern.permute.xlu0 0
    %1023 = vperm.xlu0 %1022, %v1020
    %v1024 = vpop.permute.xlu0 %1023
    %v1026 = vperm.slane %v1024, 0
    %v1027 = vadd.f32 %v1017, %v1026
    %vm1028 = vcmask 122880
    %1029 = vst.msk [vmem:[%s6] sm:$0x1] %vm1028, %v1027
    // Predicated region
    $region34: #{discriminator_forward.1} parent=1 // pred_check
      _
    $region35: #{discriminator_forward.1} parent=1 // pred_check_branch
      %1031 = sbr.rel (0) target = $region37
    $region36: #{discriminator_forward.1} parent=1 // pred_region
      _
    $region37: #{discriminator_forward.1} parent=1 // pred_fallthru
      _
    // Predicated region
    $region38: #{discriminator_forward.1} parent=1 // pred_check
      _
    $region39: #{discriminator_forward.1} parent=1 // pred_check_branch
      %1033 = sbr.rel (0) target = $region41
    $region40: #{discriminator_forward.1} parent=1 // pred_region
      _
    $region41: #{discriminator_forward.1} parent=1 // pred_fallthru
      _
    %1034 = vsyncpa [#allocation4], 1
    %1035 = vsyncpa [#allocation6], 1

</llo_original>
